<compile_context>
chip_gen: v7x
topology: tpu7x:2x2x1
jax: 0.10.0
libtpu: 0.0.40
codegen_flags: <defaults>
</compile_context>

<pallas_src>
import jax
import jax.numpy as jnp
from jax.experimental import pallas as pl

# ----------------------------- problem sizes --------------------------------
N, E, G = 16, 32, 2          # nodes, edges, graphs in the batch
H, M, R = 32, 16, 8          # hidden_channels, middle_channels, num_radial
DSH = 4                      # irreps_edge = "1x0e + 1x1o"  -> dim 1 + dim 3
EPS = 1e-5


# ------------------------- fused interaction kernel -------------------------
def _interaction_kernel(x_ref, rbf_ref, sh_ref, asum_ref, adst_ref,
                        bone_ref, invc_ref,
                        w1r_ref, b1_ref, wmg_ref, bm_ref,
                        gamma_ref, beta_ref, alpha_ref,
                        ebnw_ref, ebnb_ref,
                        xout_ref, posout_ref):
    x = x_ref[...]                                                    # [N, H]

    # ---- edge path (I2EConv + message half of E2IConv) ----
    # gather-and-add of endpoint features as ONE one-hot matmul: [E,N]@[N,H]
    xsum = jnp.dot(asum_ref[...], x, preferred_element_type=jnp.float32)
    feat = jnp.concatenate([xsum, rbf_ref[...]], axis=-1)             # [E, H+R]
    h = jax.nn.silu(
        jnp.dot(feat, w1r_ref[...], preferred_element_type=jnp.float32)
        + b1_ref[...])                                                # [E, M]
    # one wide matmul producing message + gate lanes together
    hw = jnp.dot(h, wmg_ref[...], preferred_element_type=jnp.float32)  # [E, H+DSH]
    msg = jax.nn.silu(hw[:, :H] + bm_ref[...])                        # [E, H]
    pos_raw = sh_ref[...] * hw[:, H:H + DSH]                          # [E, DSH]

    # ---- scatter-add to destination nodes + residual ----
    m_agg = jnp.dot(adst_ref[...], msg, preferred_element_type=jnp.float32)  # [N,H]
    y = x + m_agg

    # ---- GraphNorm: per-graph masked VPU reductions (G unrolled) ----
    invc = invc_ref[...]                                              # [1, G]
    mean_b = jnp.zeros_like(y)
    for g in range(G):
        mask = bone_ref[:, g:g + 1]                                   # [N, 1]
        mu = jnp.sum(mask * y, axis=0, keepdims=True) * invc[0:1, g:g + 1]
        mean_b = mean_b + mask * mu                                   # [N, H]
    yc = y - alpha_ref[...] * mean_b
    yc2 = yc * yc
    var_b = jnp.zeros_like(y)
    for g in range(G):
        mask = bone_ref[:, g:g + 1]
        var = jnp.sum(mask * yc2, axis=0, keepdims=True) * invc[0:1, g:g + 1]
        var_b = var_b + mask * var
    # rsqrt + multiply (EUP), single full-tile store
    xout_ref[...] = (gamma_ref[...] * yc * jax.lax.rsqrt(var_b + EPS)
                     + beta_ref[...])

    # ---- e3nn-style BatchNorm over irreps "1x0e + 1x1o" on pos_raw ----
    w = ebnw_ref[...]                                                 # [1, 2]
    # scalar irrep 1x0e (column 0): subtract mean, normalize by component var
    s = pos_raw[:, 0:1]
    s_mean = jnp.mean(s, axis=0, keepdims=True)
    sc = s - s_mean
    s_var = jnp.mean(sc * sc, axis=0, keepdims=True)
    s_out = sc * jax.lax.rsqrt(s_var + EPS) * w[0:1, 0:1] + ebnb_ref[...]
    # vector irrep 1x1o (columns 1..3): normalize by mean squared component
    v = pos_raw[:, 1:DSH]
    v_norm = jnp.mean(v * v, axis=(0, 1), keepdims=True)
    v_out = v * jax.lax.rsqrt(v_norm + EPS) * w[0:1, 1:2]
    # build full [E, DSH] result and write it with one store
    posout_ref[...] = jnp.concatenate([s_out, v_out], axis=-1)


def interaction_fused(x, rbf, edge_sh, asum, adst, bone, invc, params):
    # Single invocation (no grid): every operand and intermediate lives in
    # VMEM for the whole kernel; nothing round-trips through HBM.
    return pl.pallas_call(
        _interaction_kernel,
        out_shape=(jax.ShapeDtypeStruct((N, H), jnp.float32),
                   jax.ShapeDtypeStruct((E, DSH), jnp.float32)),
    )(x, rbf, edge_sh, asum, adst, bone, invc,
      params["w1r"], params["b1"], params["wmg"], params["bm"],
      params["gn_gamma"], params["gn_beta"], params["gn_alpha"],
      params["ebn_w"], params["ebn_b"])


# ------------------------------- parameters ---------------------------------
def init_params(key):
    ks = jax.random.split(key, 4)
    sc = lambda fan_in: 1.0 / jnp.sqrt(jnp.float32(fan_in))
    w1 = jax.random.normal(ks[0], (H, M), jnp.float32) * sc(H)
    wr = jax.random.normal(ks[1], (R, M), jnp.float32) * sc(R)
    wg = jax.random.normal(ks[2], (M, 2), jnp.float32) * sc(M)   # per-irrep gate
    wm = jax.random.normal(ks[3], (M, H), jnp.float32) * sc(M)
    # expand per-irrep gate to per-component gate: 1x0e -> 1 col, 1x1o -> 3 cols
    expand = jnp.array([[1., 0., 0., 0.],
                        [0., 1., 1., 1.]], jnp.float32)
    return {
        # pre-concatenated weights: fewer, wider MXU pushes in the kernel
        "w1r": jnp.concatenate([w1, wr], axis=0),                 # [H+R, M]
        "b1": jnp.zeros((1, M), jnp.float32),
        "wmg": jnp.concatenate([wm, wg @ expand], axis=1),        # [M, H+DSH]
        "bm": jnp.zeros((1, H), jnp.float32),
        # GraphNorm defaults (weight=1, bias=0, mean_scale=1)
        "gn_gamma": jnp.ones((1, H), jnp.float32),
        "gn_beta": jnp.zeros((1, H), jnp.float32),
        "gn_alpha": jnp.ones((1, H), jnp.float32),
        # e3nn BatchNorm affine defaults (weight=1 per irrep, bias=0 scalars)
        "ebn_w": jnp.ones((1, 2), jnp.float32),
        "ebn_b": jnp.zeros((1, 1), jnp.float32),
    }


# ------------------------------ forward glue ---------------------------------
def interaction_e_forward(params, x, pos, edge_index, rbf, edge_sh, batch):
    src, dst = edge_index[0], edge_index[1]
    nid = jnp.arange(N)
    # graph-structure one-hots (plain-JAX glue); gathers/scatters run inside
    # the kernel as MXU matmuls, so x / msg never round-trip through HBM.
    asum = ((src[:, None] == nid[None, :]).astype(jnp.float32)
            + (dst[:, None] == nid[None, :]).astype(jnp.float32))    # [E, N]
    adst = (dst[None, :] == nid[:, None]).astype(jnp.float32)        # [N, E]
    bone = (batch[:, None] == jnp.arange(G)[None, :]).astype(jnp.float32)  # [N, G]
    invc = (1.0 / jnp.sum(bone, axis=0))[None, :]                    # [1, G]
    x_out, pos_out = interaction_fused(x, rbf, edge_sh, asum, adst, bone,
                                       invc, params)
    return x_out, pos_out


# ---------------------------------- main -------------------------------------
if __name__ == "__main__":
    key = jax.random.PRNGKey(0)
    k_p, k_x, k_pos, k_rbf, k_s, k_d = jax.random.split(key, 6)

    params = init_params(k_p)

    x = jax.random.normal(k_x, (N, H), jnp.float32)
    pos = jax.random.normal(k_pos, (N, 3), jnp.float32)
    rbf = jax.random.uniform(k_rbf, (E, R), jnp.float32)
    src = jax.random.randint(k_s, (E,), 0, N, dtype=jnp.int32)
    dst = jax.random.randint(k_d, (E,), 0, N, dtype=jnp.int32)
    edge_index = jnp.stack([src, dst], axis=0)
    batch = jnp.concatenate([jnp.zeros(N // 2, jnp.int32),
                             jnp.ones(N // 2, jnp.int32)])

    # edge spherical harmonics for irreps "1x0e + 1x1o": [const, unit direction]
    rel = pos[dst] - pos[src]
    dirs = rel / (jnp.linalg.norm(rel, axis=-1, keepdims=True) + 1e-9)
    edge_sh = jnp.concatenate([jnp.ones((E, 1), jnp.float32), dirs], axis=-1)

    fwd = jax.jit(interaction_e_forward)
    x_out, pos_out = fwd(params, x, pos, edge_index, rbf, edge_sh, batch)
    jax.block_until_ready((x_out, pos_out))

    assert x_out.shape == (N, H) and pos_out.shape == (E, DSH)
    assert bool(jnp.all(jnp.isfinite(x_out))) and bool(jnp.all(jnp.isfinite(pos_out)))
    print("KERNEL_OK")
</pallas_src>

<mosaic_0001>
module attributes {stable_mosaic.version = 11 : i64} {
  func.func @_interaction_kernel(%arg0: memref<16x32xf32, #tpu.memory_space<vmem>>, %arg1: memref<32x8xf32, #tpu.memory_space<vmem>>, %arg2: memref<32x4xf32, #tpu.memory_space<vmem>>, %arg3: memref<32x16xf32, #tpu.memory_space<vmem>>, %arg4: memref<16x32xf32, #tpu.memory_space<vmem>>, %arg5: memref<16x2xf32, #tpu.memory_space<vmem>>, %arg6: memref<1x2xf32, #tpu.memory_space<vmem>>, %arg7: memref<40x16xf32, #tpu.memory_space<vmem>>, %arg8: memref<1x16xf32, #tpu.memory_space<vmem>>, %arg9: memref<16x36xf32, #tpu.memory_space<vmem>>, %arg10: memref<1x32xf32, #tpu.memory_space<vmem>>, %arg11: memref<1x32xf32, #tpu.memory_space<vmem>>, %arg12: memref<1x32xf32, #tpu.memory_space<vmem>>, %arg13: memref<1x32xf32, #tpu.memory_space<vmem>>, %arg14: memref<1x2xf32, #tpu.memory_space<vmem>>, %arg15: memref<1x1xf32, #tpu.memory_space<vmem>>, %arg16: memref<16x32xf32, #tpu.memory_space<vmem>>, %arg17: memref<32x4xf32, #tpu.memory_space<vmem>>) attributes {dimension_semantics = [], scalar_prefetch = 0 : i64, scratch_operands = 0 : i64, tpu.core_type = #tpu.core_type<tc>} {
    %c0 = arith.constant 0 : index
    %c0_0 = arith.constant 0 : index
    %0 = vector.load %arg0[%c0, %c0_0] : memref<16x32xf32, #tpu.memory_space<vmem>>, vector<16x32xf32>
    %c0_1 = arith.constant 0 : index
    %c0_2 = arith.constant 0 : index
    %1 = vector.load %arg3[%c0_1, %c0_2] : memref<32x16xf32, #tpu.memory_space<vmem>>, vector<32x16xf32>
    %cst = arith.constant dense<0.000000e+00> : vector<32x32xf32>
    %2 = tpu.matmul %1, %0, %cst {dimension_numbers = #tpu.dot_dimension_numbers<[1], [0], [0], [1], [0, 0, 1, 1], [], []>} : vector<32x16xf32>, vector<16x32xf32>, vector<32x32xf32> -> vector<32x32xf32>
    %c0_3 = arith.constant 0 : index
    %c0_4 = arith.constant 0 : index
    %3 = vector.load %arg1[%c0_3, %c0_4] : memref<32x8xf32, #tpu.memory_space<vmem>>, vector<32x8xf32>
    %4 = tpu.concatenate %2, %3 in 1 : vector<32x32xf32>, vector<32x8xf32> -> vector<32x40xf32>
    %c0_5 = arith.constant 0 : index
    %c0_6 = arith.constant 0 : index
    %5 = vector.load %arg7[%c0_5, %c0_6] : memref<40x16xf32, #tpu.memory_space<vmem>>, vector<40x16xf32>
    %cst_7 = arith.constant dense<0.000000e+00> : vector<32x16xf32>
    %6 = tpu.matmul %4, %5, %cst_7 {dimension_numbers = #tpu.dot_dimension_numbers<[1], [0], [0], [1], [0, 0, 1, 1], [], []>} : vector<32x40xf32>, vector<40x16xf32>, vector<32x16xf32> -> vector<32x16xf32>
    %c0_8 = arith.constant 0 : index
    %c0_9 = arith.constant 0 : index
    %7 = vector.load %arg8[%c0_8, %c0_9] : memref<1x16xf32, #tpu.memory_space<vmem>>, vector<1x16xf32>
    %8 = vector.broadcast %7 : vector<1x16xf32> to vector<32x16xf32>
    %9 = arith.addf %6, %8 : vector<32x16xf32>
    %10 = arith.negf %9 : vector<32x16xf32>
    %11 = math.exp %10 : vector<32x16xf32>
    %cst_10 = arith.constant 1.000000e+00 : f32
    %12 = vector.broadcast %cst_10 : f32 to vector<32x16xf32>
    %13 = arith.addf %12, %11 : vector<32x16xf32>
    %14 = arith.divf %12, %13 : vector<32x16xf32>
    %15 = arith.mulf %9, %14 : vector<32x16xf32>
    %c0_11 = arith.constant 0 : index
    %c0_12 = arith.constant 0 : index
    %16 = vector.load %arg9[%c0_11, %c0_12] : memref<16x36xf32, #tpu.memory_space<vmem>>, vector<16x36xf32>
    %cst_13 = arith.constant dense<0.000000e+00> : vector<32x36xf32>
    %17 = tpu.matmul %15, %16, %cst_13 {dimension_numbers = #tpu.dot_dimension_numbers<[1], [0], [0], [1], [0, 0, 1, 1], [], []>} : vector<32x16xf32>, vector<16x36xf32>, vector<32x36xf32> -> vector<32x36xf32>
    %18 = vector.extract_strided_slice %17 {offsets = [0, 0], sizes = [32, 32], strides = [1, 1]} : vector<32x36xf32> to vector<32x32xf32>
    %c0_14 = arith.constant 0 : index
    %c0_15 = arith.constant 0 : index
    %19 = vector.load %arg10[%c0_14, %c0_15] : memref<1x32xf32, #tpu.memory_space<vmem>>, vector<1x32xf32>
    %20 = vector.broadcast %19 : vector<1x32xf32> to vector<32x32xf32>
    %21 = arith.addf %18, %20 : vector<32x32xf32>
    %22 = arith.negf %21 : vector<32x32xf32>
    %23 = math.exp %22 : vector<32x32xf32>
    %cst_16 = arith.constant 1.000000e+00 : f32
    %24 = vector.broadcast %cst_16 : f32 to vector<32x32xf32>
    %25 = arith.addf %24, %23 : vector<32x32xf32>
    %26 = arith.divf %24, %25 : vector<32x32xf32>
    %27 = arith.mulf %21, %26 : vector<32x32xf32>
    %c0_17 = arith.constant 0 : index
    %c0_18 = arith.constant 0 : index
    %28 = vector.load %arg2[%c0_17, %c0_18] : memref<32x4xf32, #tpu.memory_space<vmem>>, vector<32x4xf32>
    %29 = vector.extract_strided_slice %17 {offsets = [0, 32], sizes = [32, 4], strides = [1, 1]} : vector<32x36xf32> to vector<32x4xf32>
    %30 = arith.mulf %28, %29 : vector<32x4xf32>
    %c0_19 = arith.constant 0 : index
    %c0_20 = arith.constant 0 : index
    %31 = vector.load %arg4[%c0_19, %c0_20] : memref<16x32xf32, #tpu.memory_space<vmem>>, vector<16x32xf32>
    %cst_21 = arith.constant dense<0.000000e+00> : vector<16x32xf32>
    %32 = tpu.matmul %31, %27, %cst_21 {dimension_numbers = #tpu.dot_dimension_numbers<[1], [0], [0], [1], [0, 0, 1, 1], [], []>} : vector<16x32xf32>, vector<32x32xf32>, vector<16x32xf32> -> vector<16x32xf32>
    %33 = arith.addf %0, %32 : vector<16x32xf32>
    %c0_22 = arith.constant 0 : index
    %c0_23 = arith.constant 0 : index
    %34 = vector.load %arg6[%c0_22, %c0_23] : memref<1x2xf32, #tpu.memory_space<vmem>>, vector<1x2xf32>
    %cst_24 = arith.constant 0.000000e+00 : f32
    %35 = vector.broadcast %cst_24 : f32 to vector<16x32xf32>
    %c0_25 = arith.constant 0 : index
    %c0_26 = arith.constant 0 : index
    %36 = vector.load %arg5[%c0_25, %c0_26] : memref<16x2xf32, #tpu.memory_space<vmem>>, vector<16x1xf32>
    %37 = vector.broadcast %36 : vector<16x1xf32> to vector<16x32xf32>
    %38 = arith.mulf %37, %33 : vector<16x32xf32>
    %cst_27 = arith.constant dense<0.000000e+00> : vector<32xf32>
    %39 = vector.multi_reduction <add>, %38, %cst_27 [0] : vector<16x32xf32> to vector<32xf32>
    %40 = vector.shape_cast %39 : vector<32xf32> to vector<1x32xf32>
    %41 = vector.extract_strided_slice %34 {offsets = [0, 0], sizes = [1, 1], strides = [1, 1]} : vector<1x2xf32> to vector<1x1xf32>
    %42 = vector.broadcast %41 : vector<1x1xf32> to vector<1x32xf32>
    %43 = arith.mulf %40, %42 : vector<1x32xf32>
    %44 = vector.broadcast %36 : vector<16x1xf32> to vector<16x32xf32>
    %45 = vector.broadcast %43 : vector<1x32xf32> to vector<16x32xf32>
    %46 = arith.mulf %44, %45 : vector<16x32xf32>
    %47 = arith.addf %35, %46 : vector<16x32xf32>
    %c0_28 = arith.constant 0 : index
    %c1 = arith.constant 1 : index
    %48 = vector.load %arg5[%c0_28, %c1] : memref<16x2xf32, #tpu.memory_space<vmem>>, vector<16x1xf32>
    %49 = vector.broadcast %48 : vector<16x1xf32> to vector<16x32xf32>
    %50 = arith.mulf %49, %33 : vector<16x32xf32>
    %cst_29 = arith.constant dense<0.000000e+00> : vector<32xf32>
    %51 = vector.multi_reduction <add>, %50, %cst_29 [0] : vector<16x32xf32> to vector<32xf32>
    %52 = vector.shape_cast %51 : vector<32xf32> to vector<1x32xf32>
    %53 = vector.extract_strided_slice %34 {offsets = [0, 1], sizes = [1, 1], strides = [1, 1]} : vector<1x2xf32> to vector<1x1xf32>
    %54 = vector.broadcast %53 : vector<1x1xf32> to vector<1x32xf32>
    %55 = arith.mulf %52, %54 : vector<1x32xf32>
    %56 = vector.broadcast %48 : vector<16x1xf32> to vector<16x32xf32>
    %57 = vector.broadcast %55 : vector<1x32xf32> to vector<16x32xf32>
    %58 = arith.mulf %56, %57 : vector<16x32xf32>
    %59 = arith.addf %47, %58 : vector<16x32xf32>
    %c0_30 = arith.constant 0 : index
    %c0_31 = arith.constant 0 : index
    %60 = vector.load %arg13[%c0_30, %c0_31] : memref<1x32xf32, #tpu.memory_space<vmem>>, vector<1x32xf32>
    %61 = vector.broadcast %60 : vector<1x32xf32> to vector<16x32xf32>
    %62 = arith.mulf %61, %59 : vector<16x32xf32>
    %63 = arith.subf %33, %62 : vector<16x32xf32>
    %64 = arith.mulf %63, %63 : vector<16x32xf32>
    %cst_32 = arith.constant 0.000000e+00 : f32
    %65 = vector.broadcast %cst_32 : f32 to vector<16x32xf32>
    %c0_33 = arith.constant 0 : index
    %c0_34 = arith.constant 0 : index
    %66 = vector.load %arg5[%c0_33, %c0_34] : memref<16x2xf32, #tpu.memory_space<vmem>>, vector<16x1xf32>
    %67 = vector.broadcast %66 : vector<16x1xf32> to vector<16x32xf32>
    %68 = arith.mulf %67, %64 : vector<16x32xf32>
    %cst_35 = arith.constant dense<0.000000e+00> : vector<32xf32>
    %69 = vector.multi_reduction <add>, %68, %cst_35 [0] : vector<16x32xf32> to vector<32xf32>
    %70 = vector.shape_cast %69 : vector<32xf32> to vector<1x32xf32>
    %71 = vector.extract_strided_slice %34 {offsets = [0, 0], sizes = [1, 1], strides = [1, 1]} : vector<1x2xf32> to vector<1x1xf32>
    %72 = vector.broadcast %71 : vector<1x1xf32> to vector<1x32xf32>
    %73 = arith.mulf %70, %72 : vector<1x32xf32>
    %74 = vector.broadcast %66 : vector<16x1xf32> to vector<16x32xf32>
    %75 = vector.broadcast %73 : vector<1x32xf32> to vector<16x32xf32>
    %76 = arith.mulf %74, %75 : vector<16x32xf32>
    %77 = arith.addf %65, %76 : vector<16x32xf32>
    %c0_36 = arith.constant 0 : index
    %c1_37 = arith.constant 1 : index
    %78 = vector.load %arg5[%c0_36, %c1_37] : memref<16x2xf32, #tpu.memory_space<vmem>>, vector<16x1xf32>
    %79 = vector.broadcast %78 : vector<16x1xf32> to vector<16x32xf32>
    %80 = arith.mulf %79, %64 : vector<16x32xf32>
    %cst_38 = arith.constant dense<0.000000e+00> : vector<32xf32>
    %81 = vector.multi_reduction <add>, %80, %cst_38 [0] : vector<16x32xf32> to vector<32xf32>
    %82 = vector.shape_cast %81 : vector<32xf32> to vector<1x32xf32>
    %83 = vector.extract_strided_slice %34 {offsets = [0, 1], sizes = [1, 1], strides = [1, 1]} : vector<1x2xf32> to vector<1x1xf32>
    %84 = vector.broadcast %83 : vector<1x1xf32> to vector<1x32xf32>
    %85 = arith.mulf %82, %84 : vector<1x32xf32>
    %86 = vector.broadcast %78 : vector<16x1xf32> to vector<16x32xf32>
    %87 = vector.broadcast %85 : vector<1x32xf32> to vector<16x32xf32>
    %88 = arith.mulf %86, %87 : vector<16x32xf32>
    %89 = arith.addf %77, %88 : vector<16x32xf32>
    %c0_39 = arith.constant 0 : index
    %c0_40 = arith.constant 0 : index
    %90 = vector.load %arg11[%c0_39, %c0_40] : memref<1x32xf32, #tpu.memory_space<vmem>>, vector<1x32xf32>
    %91 = vector.broadcast %90 : vector<1x32xf32> to vector<16x32xf32>
    %92 = arith.mulf %91, %63 : vector<16x32xf32>
    %cst_41 = arith.constant 9.99999974E-6 : f32
    %93 = vector.broadcast %cst_41 : f32 to vector<16x32xf32>
    %94 = arith.addf %89, %93 : vector<16x32xf32>
    %95 = math.rsqrt %94 : vector<16x32xf32>
    %96 = arith.mulf %92, %95 : vector<16x32xf32>
    %c0_42 = arith.constant 0 : index
    %c0_43 = arith.constant 0 : index
    %97 = vector.load %arg12[%c0_42, %c0_43] : memref<1x32xf32, #tpu.memory_space<vmem>>, vector<1x32xf32>
    %98 = vector.broadcast %97 : vector<1x32xf32> to vector<16x32xf32>
    %99 = arith.addf %96, %98 : vector<16x32xf32>
    %c0_44 = arith.constant 0 : index
    %c0_45 = arith.constant 0 : index
    %100 = vector.load %arg16[%c0_44, %c0_45] : memref<16x32xf32, #tpu.memory_space<vmem>>, vector<16x32xf32>
    tpu.vector_store %arg16[%c0_44, %c0_45], %99 {strides = array<i32>} : memref<16x32xf32, #tpu.memory_space<vmem>>, vector<16x32xf32>,
    %c0_46 = arith.constant 0 : index
    %c0_47 = arith.constant 0 : index
    %101 = vector.load %arg14[%c0_46, %c0_47] : memref<1x2xf32, #tpu.memory_space<vmem>>, vector<1x2xf32>
    %102 = vector.extract_strided_slice %30 {offsets = [0, 0], sizes = [32, 1], strides = [1, 1]} : vector<32x4xf32> to vector<32x1xf32>
    %cst_48 = arith.constant dense<0.000000e+00> : vector<1xf32>
    %103 = vector.multi_reduction <add>, %102, %cst_48 [0] : vector<32x1xf32> to vector<1xf32>
    %104 = vector.shape_cast %103 : vector<1xf32> to vector<1x1xf32>
    %cst_49 = arith.constant 3.200000e+01 : f32
    %105 = vector.broadcast %cst_49 : f32 to vector<1x1xf32>
    %106 = arith.divf %104, %105 : vector<1x1xf32>
    %107 = vector.broadcast %106 : vector<1x1xf32> to vector<32x1xf32>
    %108 = arith.subf %102, %107 : vector<32x1xf32>
    %109 = arith.mulf %108, %108 : vector<32x1xf32>
    %cst_50 = arith.constant dense<0.000000e+00> : vector<1xf32>
    %110 = vector.multi_reduction <add>, %109, %cst_50 [0] : vector<32x1xf32> to vector<1xf32>
    %111 = vector.shape_cast %110 : vector<1xf32> to vector<1x1xf32>
    %cst_51 = arith.constant 3.200000e+01 : f32
    %112 = vector.broadcast %cst_51 : f32 to vector<1x1xf32>
    %113 = arith.divf %111, %112 : vector<1x1xf32>
    %cst_52 = arith.constant 9.99999974E-6 : f32
    %114 = vector.broadcast %cst_52 : f32 to vector<1x1xf32>
    %115 = arith.addf %113, %114 : vector<1x1xf32>
    %116 = math.rsqrt %115 : vector<1x1xf32>
    %117 = vector.broadcast %116 : vector<1x1xf32> to vector<32x1xf32>
    %118 = arith.mulf %108, %117 : vector<32x1xf32>
    %119 = vector.extract_strided_slice %101 {offsets = [0, 0], sizes = [1, 1], strides = [1, 1]} : vector<1x2xf32> to vector<1x1xf32>
    %120 = vector.broadcast %119 : vector<1x1xf32> to vector<32x1xf32>
    %121 = arith.mulf %118, %120 : vector<32x1xf32>
    %c0_53 = arith.constant 0 : index
    %c0_54 = arith.constant 0 : index
    %122 = vector.load %arg15[%c0_53, %c0_54] : memref<1x1xf32, #tpu.memory_space<vmem>>, vector<1x1xf32>
    %123 = vector.broadcast %122 : vector<1x1xf32> to vector<32x1xf32>
    %124 = arith.addf %121, %123 : vector<32x1xf32>
    %125 = vector.extract_strided_slice %30 {offsets = [0, 1], sizes = [32, 3], strides = [1, 1]} : vector<32x4xf32> to vector<32x3xf32>
    %126 = arith.mulf %125, %125 : vector<32x3xf32>
    %127 = vector.shape_cast %126 : vector<32x3xf32> to vector<1x32x3xf32>
    %cst_55 = arith.constant dense<0.000000e+00> : vector<1xf32>
    %128 = vector.multi_reduction <add>, %127, %cst_55 [1, 2] : vector<1x32x3xf32> to vector<1xf32>
    %129 = vector.shape_cast %128 : vector<1xf32> to vector<1x1x1xf32>
    %130 = vector.extract %129[0, 0, 0] : f32 from vector<1x1x1xf32>
    %131 = vector.broadcast %130 : f32 to vector<1x1xf32>
    %cst_56 = arith.constant 9.600000e+01 : f32
    %132 = vector.broadcast %cst_56 : f32 to vector<1x1xf32>
    %133 = arith.divf %131, %132 : vector<1x1xf32>
    %cst_57 = arith.constant 9.99999974E-6 : f32
    %134 = vector.broadcast %cst_57 : f32 to vector<1x1xf32>
    %135 = arith.addf %133, %134 : vector<1x1xf32>
    %136 = math.rsqrt %135 : vector<1x1xf32>
    %137 = vector.broadcast %136 : vector<1x1xf32> to vector<32x3xf32>
    %138 = arith.mulf %125, %137 : vector<32x3xf32>
    %139 = vector.extract_strided_slice %101 {offsets = [0, 1], sizes = [1, 1], strides = [1, 1]} : vector<1x2xf32> to vector<1x1xf32>
    %140 = vector.broadcast %139 : vector<1x1xf32> to vector<32x3xf32>
    %141 = arith.mulf %138, %140 : vector<32x3xf32>
    %142 = tpu.concatenate %124, %141 in 1 : vector<32x1xf32>, vector<32x3xf32> -> vector<32x4xf32>
    %c0_58 = arith.constant 0 : index
    %c0_59 = arith.constant 0 : index
    %143 = vector.load %arg17[%c0_58, %c0_59] : memref<32x4xf32, #tpu.memory_space<vmem>>, vector<32x4xf32>
    tpu.vector_store %arg17[%c0_58, %c0_59], %142 {strides = array<i32>} : memref<32x4xf32, #tpu.memory_space<vmem>>, vector<32x4xf32>,
    return
  }
}

</mosaic_0001>

<llo_original>
// kernel: interaction_e_forward.1
$region0: #{interaction_e_forward.1}
  #allocation0 [shape = 'u32[]', space=smem, size = 0x4, offset = 0x4, fixed_abs, tag = 'smem constant byte address 0x4 - core index']
  #allocation1 [shape = 'u32[144,128]{1,0:T(1,128)}', space=vmem, size = 0x12000, scoped, tag = 'internal scratch']
  #allocation2 [shape = 'f32[1,1]{1,0:T(1,128)S(1)}', space=vmem, size = 0x200, scoped, tag = 'scoped memory for interaction_e_forward.1']
  %s0 = inlined_call_operand.vmem [shape: f32[16,32], index: 0, kind: input, shape index: {}]
  %s1 = inlined_call_operand.vmem [shape: f32[32,8], index: 1, kind: input, shape index: {}]
  %s2 = inlined_call_operand.vmem [shape: f32[32,4], index: 2, kind: input, shape index: {}]
  %s3 = inlined_call_operand.vmem [shape: f32[32,16], index: 3, kind: input, shape index: {}]
  %s4 = inlined_call_operand.vmem [shape: f32[16,32], index: 4, kind: input, shape index: {}]
  %s5 = inlined_call_operand.vmem [shape: f32[16,2], index: 5, kind: input, shape index: {}]
  %s6 = inlined_call_operand.vmem [shape: f32[1,2], index: 6, kind: input, shape index: {}]
  %s7 = inlined_call_operand.vmem [shape: f32[40,16], index: 7, kind: input, shape index: {}]
  %s8 = inlined_call_operand.vmem [shape: f32[1,16], index: 8, kind: input, shape index: {}]
  %s9 = inlined_call_operand.vmem [shape: f32[16,36], index: 9, kind: input, shape index: {}]
  %s10 = inlined_call_operand.vmem [shape: f32[1,32], index: 10, kind: input, shape index: {}]
  %s11 = inlined_call_operand.vmem [shape: f32[1,32], index: 11, kind: input, shape index: {}]
  %s12 = inlined_call_operand.vmem [shape: f32[1,32], index: 12, kind: input, shape index: {}]
  %s13 = inlined_call_operand.vmem [shape: f32[1,32], index: 13, kind: input, shape index: {}]
  %s14 = inlined_call_operand.vmem [shape: f32[1,2], index: 14, kind: input, shape index: {}]
  %s15 = inlined_call_operand.<no memory space> [shape: f32[1,1], index: 15, kind: input, shape index: {}]
  %s16 = inlined_call_operand.hbm [shape: f32[16,32], index: 16, kind: output, shape index: {0}]
  %s17 = inlined_call_operand.vmem [shape: f32[32,4], index: 17, kind: output, shape index: {1}]
  %18 = xla_tuple %s16, %s17
  %s19 = sld [smem:[#allocation0]]
  $region82: #{interaction_e_forward.1} parent=0
    _
  %s21 = ssub.s32 1, %s19
  %s22 = scalar_select 0, %s21, %s19
  %v23 = vstv %s15
  %24 = vst [vmem:[#allocation2] sm:$0x1] %v23
  $region1: #{interaction_e_forward.1} parent=0
    #allocation3 [shape = 'u8[8192]{0}', space=vmem, size = 0x2000, scoped, tag = 'output window, operand 0, single buffered']
    #allocation4 [shape = 's32[1]{0}', space=sflag, size = 0x4, scoped, tag = 'scoped memory for interaction_e_forward.1']
    %25 = vsyncpa [#allocation4], 0
    // Predicated region
    $region2: #{interaction_e_forward.1} parent=1 // pred_check
      _
    $region3: #{interaction_e_forward.1} parent=1 // pred_check_branch
      %27 = sbr.rel (0) target = $region5
    $region4: #{interaction_e_forward.1} parent=1 // pred_region
      _
    $region5: #{interaction_e_forward.1} parent=1 // pred_fallthru
      _
    // Predicated region
    $region6: #{interaction_e_forward.1} parent=1 // pred_check
      _
    $region7: #{interaction_e_forward.1} parent=1 // pred_check_branch
      %29 = sbr.rel (0) target = $region9
    $region8: #{interaction_e_forward.1} parent=1 // pred_region
      _
    $region9: #{interaction_e_forward.1} parent=1 // pred_fallthru
      _
    // Predicated region
    $region10: #{interaction_e_forward.1} parent=1 // pred_check
      _
    $region11: #{interaction_e_forward.1} parent=1 // pred_check_branch
      %31 = sbr.rel (0) target = $region13
    $region12: #{interaction_e_forward.1} parent=1 // pred_region
      _
    $region13: #{interaction_e_forward.1} parent=1 // pred_fallthru
      _
    // Predicated region
    $region14: #{interaction_e_forward.1} parent=1 // pred_check
      _
    $region15: #{interaction_e_forward.1} parent=1 // pred_check_branch
      %33 = sbr.rel (0) target = $region17
    $region16: #{interaction_e_forward.1} parent=1 // pred_region
      _
    $region17: #{interaction_e_forward.1} parent=1 // pred_fallthru
      _
    // Predicated region
    $region18: #{interaction_e_forward.1} parent=1 // pred_check
      _
    $region19: #{interaction_e_forward.1} parent=1 // pred_check_branch
      %35 = sbr.rel (0) target = $region21
    $region20: #{interaction_e_forward.1} parent=1 // pred_region
      _
    $region21: #{interaction_e_forward.1} parent=1 // pred_fallthru
      _
    // Predicated region
    $region22: #{interaction_e_forward.1} parent=1 // pred_check
      _
    $region23: #{interaction_e_forward.1} parent=1 // pred_check_branch
      %37 = sbr.rel (0) target = $region25
    $region24: #{interaction_e_forward.1} parent=1 // pred_region
      _
    $region25: #{interaction_e_forward.1} parent=1 // pred_fallthru
      _
    // Predicated region
    $region26: #{interaction_e_forward.1} parent=1 // pred_check
      _
    $region27: #{interaction_e_forward.1} parent=1 // pred_check_branch
      %39 = sbr.rel (0) target = $region29
    $region28: #{interaction_e_forward.1} parent=1 // pred_region
      _
    $region29: #{interaction_e_forward.1} parent=1 // pred_fallthru
      _
    // Predicated region
    $region30: #{interaction_e_forward.1} parent=1 // pred_check
      _
    $region31: #{interaction_e_forward.1} parent=1 // pred_check_branch
      %41 = sbr.rel (0) target = $region33
    $region32: #{interaction_e_forward.1} parent=1 // pred_region
      _
    $region33: #{interaction_e_forward.1} parent=1 // pred_fallthru
      _
    // Predicated region
    $region34: #{interaction_e_forward.1} parent=1 // pred_check
      _
    $region35: #{interaction_e_forward.1} parent=1 // pred_check_branch
      %43 = sbr.rel (0) target = $region37
    $region36: #{interaction_e_forward.1} parent=1 // pred_region
      _
    $region37: #{interaction_e_forward.1} parent=1 // pred_fallthru
      _
    // Predicated region
    $region38: #{interaction_e_forward.1} parent=1 // pred_check
      _
    $region39: #{interaction_e_forward.1} parent=1 // pred_check_branch
      %45 = sbr.rel (0) target = $region41
    $region40: #{interaction_e_forward.1} parent=1 // pred_region
      _
    $region41: #{interaction_e_forward.1} parent=1 // pred_fallthru
      _
    // Predicated region
    $region42: #{interaction_e_forward.1} parent=1 // pred_check
      _
    $region43: #{interaction_e_forward.1} parent=1 // pred_check_branch
      %47 = sbr.rel (0) target = $region45
    $region44: #{interaction_e_forward.1} parent=1 // pred_region
      _
    $region45: #{interaction_e_forward.1} parent=1 // pred_fallthru
      _
    // Predicated region
    $region46: #{interaction_e_forward.1} parent=1 // pred_check
      _
    $region47: #{interaction_e_forward.1} parent=1 // pred_check_branch
      %49 = sbr.rel (0) target = $region49
    $region48: #{interaction_e_forward.1} parent=1 // pred_region
      _
    $region49: #{interaction_e_forward.1} parent=1 // pred_fallthru
      _
    // Predicated region
    $region50: #{interaction_e_forward.1} parent=1 // pred_check
      _
    $region51: #{interaction_e_forward.1} parent=1 // pred_check_branch
      %51 = sbr.rel (0) target = $region53
    $region52: #{interaction_e_forward.1} parent=1 // pred_region
      _
    $region53: #{interaction_e_forward.1} parent=1 // pred_fallthru
      _
    // Predicated region
    $region54: #{interaction_e_forward.1} parent=1 // pred_check
      _
    $region55: #{interaction_e_forward.1} parent=1 // pred_check_branch
      %53 = sbr.rel (0) target = $region57
    $region56: #{interaction_e_forward.1} parent=1 // pred_region
      _
    $region57: #{interaction_e_forward.1} parent=1 // pred_fallthru
      _
    // Predicated region
    $region58: #{interaction_e_forward.1} parent=1 // pred_check
      _
    $region59: #{interaction_e_forward.1} parent=1 // pred_check_branch
      %55 = sbr.rel (0) target = $region61
    $region60: #{interaction_e_forward.1} parent=1 // pred_region
      _
    $region61: #{interaction_e_forward.1} parent=1 // pred_fallthru
      _
    // Predicated region
    $region62: #{interaction_e_forward.1} parent=1 // pred_check
      _
    $region63: #{interaction_e_forward.1} parent=1 // pred_check_branch
      %57 = sbr.rel (0) target = $region65
    $region64: #{interaction_e_forward.1} parent=1 // pred_region
      _
    $region65: #{interaction_e_forward.1} parent=1 // pred_fallthru
      _
    %v58 = vld [vmem:[%s0] sm:$0xff]
    %v59 = vld [vmem:[%s0 + $0x8] sm:$0xff]
    %v60 = vld [vmem:[%s3] sm:$0xff]
    %v61 = vld [vmem:[%s3 + $0x8] sm:$0xff]
    %v62 = vld [vmem:[%s3 + $0x10] sm:$0xff]
    %v63 = vld [vmem:[%s3 + $0x18] sm:$0xff]
    %vm64 = vcmask 130048
    %v66 = vsel %vm64, %v60, 0
    %v69 = vsel %vm64, %v61, 0
    %v72 = vsel %vm64, %v62, 0
    %v75 = vsel %vm64, %v63, 0
    %77 = vmatprep.subr.mxu0 0.0
    %78 = vmatpush1.msra.mxu0 %v58
    %79 = vmatprep.subr.mxu0 0.0
    %80 = vmatpush1.msra.mxu0 %v59
    %81 = vmatprep.subr.mxu0 0.0
    %82 = vmatpush1.msra.mxu0 0.0
    %83 = vmatprep.subr.mxu0 0.0
    %84 = vmatpush1.msra.mxu0 0.0
    %85 = vmatprep.subr.mxu0 0.0
    %86 = vmatpush1.msra.mxu0 0.0
    %87 = vmatprep.subr.mxu0 0.0
    %88 = vmatpush1.msra.mxu0 0.0
    %89 = vmatprep.subr.mxu0 0.0
    %90 = vmatpush1.msra.mxu0 0.0
    %91 = vmatprep.subr.mxu0 0.0
    %92 = vmatpush1.msra.mxu0 0.0
    %93 = vmatprep.subr.mxu0 0.0
    %94 = vmatpush1.msra.mxu0 0.0
    %95 = vmatprep.subr.mxu0 0.0
    %96 = vmatpush1.msra.mxu0 0.0
    %97 = vmatprep.subr.mxu0 0.0
    %98 = vmatpush1.msra.mxu0 0.0
    %99 = vmatprep.subr.mxu0 0.0
    %100 = vmatpush1.msra.mxu0 0.0
    %101 = vmatprep.subr.mxu0 0.0
    %102 = vmatpush1.msra.mxu0 0.0
    %103 = vmatprep.subr.mxu0 0.0
    %104 = vmatpush1.msra.mxu0 0.0
    %105 = vmatprep.subr.mxu0 0.0
    %106 = vmatpush1.msra.mxu0 0.0
    %107 = vmatprep.subr.mxu0 0.0
    %108 = vmatpush1.msra.mxu0 0.0
    %109 = vmatprep.subr.mxu0 0.0
    %110 = vmatpush1.msra.mxu0 0.0
    %111 = vmatprep.subr.mxu0 0.0
    %112 = vmatpush1.msra.mxu0 0.0
    %113 = vmatprep.subr.mxu0 0.0
    %114 = vmatpush1.msra.mxu0 0.0
    %115 = vmatprep.subr.mxu0 0.0
    %116 = vmatpush1.msra.mxu0 0.0
    %117 = vmatprep.subr.mxu0 0.0
    %118 = vmatpush1.msra.mxu0 0.0
    %119 = vmatprep.subr.mxu0 0.0
    %120 = vmatpush1.msra.mxu0 0.0
    %121 = vmatprep.subr.mxu0 0.0
    %122 = vmatpush1.msra.mxu0 0.0
    %123 = vmatprep.subr.mxu0 0.0
    %124 = vmatpush1.msra.mxu0 0.0
    %125 = vmatprep.subr.mxu0 0.0
    %126 = vmatpush1.msra.mxu0 0.0
    %127 = vmatprep.subr.mxu0 0.0
    %128 = vmatpush1.msra.mxu0 0.0
    %129 = vmatprep.subr.mxu0 0.0
    %130 = vmatpush1.msra.mxu0 0.0
    %131 = vmatprep.subr.mxu0 0.0
    %132 = vmatpush1.msra.mxu0 0.0
    %133 = vmatprep.subr.mxu0 0.0
    %134 = vmatpush1.msra.mxu0 0.0
    %135 = vmatprep.subr.mxu0 0.0
    %136 = vmatpush1.msra.mxu0 0.0
    %137 = vmatprep.subr.mxu0 0.0
    %138 = vmatpush1.msra.mxu0 0.0
    %139 = vmatprep.subr.mxu0 0.0
    %140 = vmatpush1.msra.mxu0 0.0
    %141 = vmatprep.mubr.f32.mxu0 0.0
    %142 = vmatmul.mubr.f32.gmra.mrb[0].mxu0 %v66
    %v143 = vpop.f32.mrb[0].mxu0
    %v144 = vadd.f32 0.0, %v143
    %v145 = vpop.f32.mrb[0].mxu0
    %146 = vmatprep.mubr.f32.mxu0 0.0
    %147 = vmatmul.mubr.f32.gmra.mrb[0].mxu0 %v69
    %v148 = vpop.f32.mrb[0].mxu0
    %v149 = vadd.f32 0.0, %v148
    %v150 = vpop.f32.mrb[0].mxu0
    %151 = vmatprep.mubr.f32.mxu0 0.0
    %152 = vmatmul.mubr.f32.gmra.mrb[0].mxu0 %v72
    %v153 = vpop.f32.mrb[0].mxu0
    %v154 = vadd.f32 0.0, %v153
    %v155 = vpop.f32.mrb[0].mxu0
    %156 = vmatprep.mubr.f32.mxu0 0.0
    %157 = vmatmul.mubr.f32.gmra.mrb[0].mxu0 %v75
    %v158 = vpop.f32.mrb[0].mxu0
    %v159 = vadd.f32 0.0, %v158
    %v160 = vpop.f32.mrb[0].mxu0
    %161 = vdwg.mxu0
    %v162 = vld [vmem:[%s1] sm:$0xff]
    %v163 = vld [vmem:[%s1 + $0x8] sm:$0xff]
    %v164 = vld [vmem:[%s1 + $0x10] sm:$0xff]
    %v165 = vld [vmem:[%s1 + $0x18] sm:$0xff]
    %170 = vrot.lane.b32.xlu0 %v162, 32
    %v171 = vpop.permute.xlu0 %170
    %172 = vrot.lane.b32.xlu0 %v163, 32
    %v173 = vpop.permute.xlu0 %172
    %174 = vrot.lane.b32.xlu0 %v164, 32
    %v175 = vpop.permute.xlu0 %174
    %176 = vrot.lane.b32.xlu0 %v165, 32
    %v177 = vpop.permute.xlu0 %176
    %vm182 = vcmask 261120
    %v183 = vsel %vm182, %v144, %v171
    %v184 = vsel %vm182, %v149, %v173
    %v185 = vsel %vm182, %v154, %v175
    %v186 = vsel %vm182, %v159, %v177
    %v187 = vld [vmem:[%s7] sm:$0xff]
    %v188 = vld [vmem:[%s7 + $0x8] sm:$0xff]
    %v189 = vld [vmem:[%s7 + $0x10] sm:$0xff]
    %v190 = vld [vmem:[%s7 + $0x18] sm:$0xff]
    %v191 = vld [vmem:[%s7 + $0x20] sm:$0xff]
    %v192 = vld [vmem:[%s8] sm:$0x1]
    %v194 = vlaneseq
    %v195 = vshrl.u32 %v194, 7
    %v196 = vsub.s32 0, %v195
    %v197 = vrot.slane %v192, %v196
    %vm199 = vcmask 326656
    %v201 = vsel %vm199, %v183, 0
    %v204 = vsel %vm199, %v184, 0
    %v207 = vsel %vm199, %v185, 0
    %v210 = vsel %vm199, %v186, 0
    %212 = vmatprep.subr.mxu0 0.0
    %213 = vmatpush1.msra.mxu0 %v187
    %214 = vmatprep.subr.mxu0 0.0
    %215 = vmatpush1.msra.mxu0 %v188
    %216 = vmatprep.subr.mxu0 0.0
    %217 = vmatpush1.msra.mxu0 %v189
    %218 = vmatprep.subr.mxu0 0.0
    %219 = vmatpush1.msra.mxu0 %v190
    %220 = vmatprep.subr.mxu0 0.0
    %221 = vmatpush1.msra.mxu0 %v191
    %222 = vmatprep.subr.mxu0 0.0
    %223 = vmatpush1.msra.mxu0 0.0
    %224 = vmatprep.subr.mxu0 0.0
    %225 = vmatpush1.msra.mxu0 0.0
    %226 = vmatprep.subr.mxu0 0.0
    %227 = vmatpush1.msra.mxu0 0.0
    %228 = vmatprep.subr.mxu0 0.0
    %229 = vmatpush1.msra.mxu0 0.0
    %230 = vmatprep.subr.mxu0 0.0
    %231 = vmatpush1.msra.mxu0 0.0
    %232 = vmatprep.subr.mxu0 0.0
    %233 = vmatpush1.msra.mxu0 0.0
    %234 = vmatprep.subr.mxu0 0.0
    %235 = vmatpush1.msra.mxu0 0.0
    %236 = vmatprep.subr.mxu0 0.0
    %237 = vmatpush1.msra.mxu0 0.0
    %238 = vmatprep.subr.mxu0 0.0
    %239 = vmatpush1.msra.mxu0 0.0
    %240 = vmatprep.subr.mxu0 0.0
    %241 = vmatpush1.msra.mxu0 0.0
    %242 = vmatprep.subr.mxu0 0.0
    %243 = vmatpush1.msra.mxu0 0.0
    %244 = vmatprep.subr.mxu0 0.0
    %245 = vmatpush1.msra.mxu0 0.0
    %246 = vmatprep.subr.mxu0 0.0
    %247 = vmatpush1.msra.mxu0 0.0
    %248 = vmatprep.subr.mxu0 0.0
    %249 = vmatpush1.msra.mxu0 0.0
    %250 = vmatprep.subr.mxu0 0.0
    %251 = vmatpush1.msra.mxu0 0.0
    %252 = vmatprep.subr.mxu0 0.0
    %253 = vmatpush1.msra.mxu0 0.0
    %254 = vmatprep.subr.mxu0 0.0
    %255 = vmatpush1.msra.mxu0 0.0
    %256 = vmatprep.subr.mxu0 0.0
    %257 = vmatpush1.msra.mxu0 0.0
    %258 = vmatprep.subr.mxu0 0.0
    %259 = vmatpush1.msra.mxu0 0.0
    %260 = vmatprep.subr.mxu0 0.0
    %261 = vmatpush1.msra.mxu0 0.0
    %262 = vmatprep.subr.mxu0 0.0
    %263 = vmatpush1.msra.mxu0 0.0
    %264 = vmatprep.subr.mxu0 0.0
    %265 = vmatpush1.msra.mxu0 0.0
    %266 = vmatprep.subr.mxu0 0.0
    %267 = vmatpush1.msra.mxu0 0.0
    %268 = vmatprep.subr.mxu0 0.0
    %269 = vmatpush1.msra.mxu0 0.0
    %270 = vmatprep.subr.mxu0 0.0
    %271 = vmatpush1.msra.mxu0 0.0
    %272 = vmatprep.subr.mxu0 0.0
    %273 = vmatpush1.msra.mxu0 0.0
    %274 = vmatprep.subr.mxu0 0.0
    %275 = vmatpush1.msra.mxu0 0.0
    %276 = vmatprep.mubr.f32.mxu0 0.0
    %277 = vmatmul.mubr.f32.gmra.mrb[0].mxu0 %v201
    %v278 = vpop.f32.mrb[0].mxu0
    %v279 = vadd.f32 %v197, %v278
    %v280 = vpop.f32.mrb[0].mxu0
    %281 = vmatprep.mubr.f32.mxu0 0.0
    %282 = vmatmul.mubr.f32.gmra.mrb[0].mxu0 %v204
    %v283 = vpop.f32.mrb[0].mxu0
    %v284 = vadd.f32 %v197, %v283
    %v285 = vpop.f32.mrb[0].mxu0
    %286 = vmatprep.mubr.f32.mxu0 0.0
    %287 = vmatmul.mubr.f32.gmra.mrb[0].mxu0 %v207
    %v288 = vpop.f32.mrb[0].mxu0
    %v289 = vadd.f32 %v197, %v288
    %v290 = vpop.f32.mrb[0].mxu0
    %291 = vmatprep.mubr.f32.mxu0 0.0
    %292 = vmatmul.mubr.f32.gmra.mrb[0].mxu0 %v210
    %v293 = vpop.f32.mrb[0].mxu0
    %v294 = vadd.f32 %v197, %v293
    %v295 = vpop.f32.mrb[0].mxu0
    %296 = vdwg.mxu0
    %v297 = vxor.u32 %v279, 2147483648
    %v298 = vxor.u32 %v284, 2147483648
    %v299 = vxor.u32 %v289, 2147483648
    %v300 = vxor.u32 %v294, 2147483648
    %v301 = vmul.f32 %v297, 1.442695
    %v302 = vpow.pop %v301
    %v303 = vmul.f32 %v298, 1.442695
    %v304 = vpow.pop %v303
    %v305 = vmul.f32 %v299, 1.442695
    %v306 = vpow.pop %v305
    %v307 = vmul.f32 %v300, 1.442695
    %v308 = vpow.pop %v307
    %v309 = vadd.f32 %v302, 1.0
    %v310 = vadd.f32 %v304, 1.0
    %v311 = vadd.f32 %v306, 1.0
    %v312 = vadd.f32 %v308, 1.0
    %v313 = vrcp.pop %v309
    %v314 = vmul.f32 1.0, %v313
    %v315 = vrcp.pop %v310
    %v316 = vmul.f32 1.0, %v315
    %v317 = vrcp.pop %v311
    %v318 = vmul.f32 1.0, %v317
    %v319 = vrcp.pop %v312
    %v320 = vmul.f32 1.0, %v319
    %v321 = vmul.f32 %v279, %v314
    %v322 = vmul.f32 %v284, %v316
    %v323 = vmul.f32 %v289, %v318
    %v324 = vmul.f32 %v294, %v320
    %v325 = vld [vmem:[%s9] sm:$0xff]
    %v326 = vld [vmem:[%s9 + $0x8] sm:$0xff]
    %v328 = vsel %vm64, %v321, 0
    %v331 = vsel %vm64, %v322, 0
    %v334 = vsel %vm64, %v323, 0
    %v337 = vsel %vm64, %v324, 0
    %339 = vmatprep.subr.mxu0 0.0
    %340 = vmatpush1.msra.mxu0 %v325
    %341 = vmatprep.subr.mxu0 0.0
    %342 = vmatpush1.msra.mxu0 %v326
    %343 = vmatprep.subr.mxu0 0.0
    %344 = vmatpush1.msra.mxu0 0.0
    %345 = vmatprep.subr.mxu0 0.0
    %346 = vmatpush1.msra.mxu0 0.0
    %347 = vmatprep.subr.mxu0 0.0
    %348 = vmatpush1.msra.mxu0 0.0
    %349 = vmatprep.subr.mxu0 0.0
    %350 = vmatpush1.msra.mxu0 0.0
    %351 = vmatprep.subr.mxu0 0.0
    %352 = vmatpush1.msra.mxu0 0.0
    %353 = vmatprep.subr.mxu0 0.0
    %354 = vmatpush1.msra.mxu0 0.0
    %355 = vmatprep.subr.mxu0 0.0
    %356 = vmatpush1.msra.mxu0 0.0
    %357 = vmatprep.subr.mxu0 0.0
    %358 = vmatpush1.msra.mxu0 0.0
    %359 = vmatprep.subr.mxu0 0.0
    %360 = vmatpush1.msra.mxu0 0.0
    %361 = vmatprep.subr.mxu0 0.0
    %362 = vmatpush1.msra.mxu0 0.0
    %363 = vmatprep.subr.mxu0 0.0
    %364 = vmatpush1.msra.mxu0 0.0
    %365 = vmatprep.subr.mxu0 0.0
    %366 = vmatpush1.msra.mxu0 0.0
    %367 = vmatprep.subr.mxu0 0.0
    %368 = vmatpush1.msra.mxu0 0.0
    %369 = vmatprep.subr.mxu0 0.0
    %370 = vmatpush1.msra.mxu0 0.0
    %371 = vmatprep.subr.mxu0 0.0
    %372 = vmatpush1.msra.mxu0 0.0
    %373 = vmatprep.subr.mxu0 0.0
    %374 = vmatpush1.msra.mxu0 0.0
    %375 = vmatprep.subr.mxu0 0.0
    %376 = vmatpush1.msra.mxu0 0.0
    %377 = vmatprep.subr.mxu0 0.0
    %378 = vmatpush1.msra.mxu0 0.0
    %379 = vmatprep.subr.mxu0 0.0
    %380 = vmatpush1.msra.mxu0 0.0
    %381 = vmatprep.subr.mxu0 0.0
    %382 = vmatpush1.msra.mxu0 0.0
    %383 = vmatprep.subr.mxu0 0.0
    %384 = vmatpush1.msra.mxu0 0.0
    %385 = vmatprep.subr.mxu0 0.0
    %386 = vmatpush1.msra.mxu0 0.0
    %387 = vmatprep.subr.mxu0 0.0
    %388 = vmatpush1.msra.mxu0 0.0
    %389 = vmatprep.subr.mxu0 0.0
    %390 = vmatpush1.msra.mxu0 0.0
    %391 = vmatprep.subr.mxu0 0.0
    %392 = vmatpush1.msra.mxu0 0.0
    %393 = vmatprep.subr.mxu0 0.0
    %394 = vmatpush1.msra.mxu0 0.0
    %395 = vmatprep.subr.mxu0 0.0
    %396 = vmatpush1.msra.mxu0 0.0
    %397 = vmatprep.subr.mxu0 0.0
    %398 = vmatpush1.msra.mxu0 0.0
    %399 = vmatprep.subr.mxu0 0.0
    %400 = vmatpush1.msra.mxu0 0.0
    %401 = vmatprep.subr.mxu0 0.0
    %402 = vmatpush1.msra.mxu0 0.0
    %403 = vmatprep.mubr.f32.mxu0 0.0
    %404 = vmatmul.mubr.f32.gmra.mrb[0].mxu0 %v328
    %v405 = vpop.f32.mrb[0].mxu0
    %v406 = vadd.f32 0.0, %v405
    %v407 = vpop.f32.mrb[0].mxu0
    %408 = vmatprep.mubr.f32.mxu0 0.0
    %409 = vmatmul.mubr.f32.gmra.mrb[0].mxu0 %v331
    %v410 = vpop.f32.mrb[0].mxu0
    %v411 = vadd.f32 0.0, %v410
    %v412 = vpop.f32.mrb[0].mxu0
    %413 = vmatprep.mubr.f32.mxu0 0.0
    %414 = vmatmul.mubr.f32.gmra.mrb[0].mxu0 %v334
    %v415 = vpop.f32.mrb[0].mxu0
    %v416 = vadd.f32 0.0, %v415
    %v417 = vpop.f32.mrb[0].mxu0
    %418 = vmatprep.mubr.f32.mxu0 0.0
    %419 = vmatmul.mubr.f32.gmra.mrb[0].mxu0 %v337
    %v420 = vpop.f32.mrb[0].mxu0
    %v421 = vadd.f32 0.0, %v420
    %v422 = vpop.f32.mrb[0].mxu0
    %423 = vdwg.mxu0
    %v424 = vld [vmem:[%s10] sm:$0x1]
    %v426 = vlaneseq
    %v427 = vshrl.u32 %v426, 7
    %v428 = vsub.s32 0, %v427
    %v429 = vrot.slane %v424, %v428
    %v431 = vadd.f32 %v406, %v429
    %v432 = vadd.f32 %v411, %v429
    %v433 = vadd.f32 %v416, %v429
    %v434 = vadd.f32 %v421, %v429
    %v435 = vxor.u32 %v431, 2147483648
    %v436 = vxor.u32 %v432, 2147483648
    %v437 = vxor.u32 %v433, 2147483648
    %v438 = vxor.u32 %v434, 2147483648
    %v439 = vmul.f32 %v435, 1.442695
    %v440 = vpow.pop %v439
    %v441 = vmul.f32 %v436, 1.442695
    %v442 = vpow.pop %v441
    %v443 = vmul.f32 %v437, 1.442695
    %v444 = vpow.pop %v443
    %v445 = vmul.f32 %v438, 1.442695
    %v446 = vpow.pop %v445
    %v447 = vadd.f32 %v440, 1.0
    %v448 = vadd.f32 %v442, 1.0
    %v449 = vadd.f32 %v444, 1.0
    %v450 = vadd.f32 %v446, 1.0
    %v451 = vrcp.pop %v447
    %v452 = vmul.f32 1.0, %v451
    %v453 = vrcp.pop %v448
    %v454 = vmul.f32 1.0, %v453
    %v455 = vrcp.pop %v449
    %v456 = vmul.f32 1.0, %v455
    %v457 = vrcp.pop %v450
    %v458 = vmul.f32 1.0, %v457
    %v459 = vmul.f32 %v431, %v452
    %v460 = vmul.f32 %v432, %v454
    %v461 = vmul.f32 %v433, %v456
    %v462 = vmul.f32 %v434, %v458
    %v463 = vld [vmem:[%s2] sm:$0xff]
    %v464 = vld [vmem:[%s2 + $0x8] sm:$0xff]
    %v465 = vld [vmem:[%s2 + $0x10] sm:$0xff]
    %v466 = vld [vmem:[%s2 + $0x18] sm:$0xff]
    %471 = vrot.lane.b32.xlu0 %v406, 96
    %v472 = vpop.permute.xlu0 %471
    %473 = vrot.lane.b32.xlu0 %v411, 96
    %v474 = vpop.permute.xlu0 %473
    %475 = vrot.lane.b32.xlu0 %v416, 96
    %v476 = vpop.permute.xlu0 %475
    %477 = vrot.lane.b32.xlu0 %v421, 96
    %v478 = vpop.permute.xlu0 %477
    %v483 = vmul.f32 %v463, %v472
    %v484 = vmul.f32 %v464, %v474
    %v485 = vmul.f32 %v465, %v476
    %v486 = vmul.f32 %v466, %v478
    %v487 = vld [vmem:[%s4] sm:$0xff]
    %v488 = vld [vmem:[%s4 + $0x8] sm:$0xff]
    %v490 = vsel %vm182, %v487, 0
    %v493 = vsel %vm182, %v488, 0
    %495 = vmatprep.subr.mxu0 0.0
    %496 = vmatpush1.msra.mxu0 %v459
    %497 = vmatprep.subr.mxu0 0.0
    %498 = vmatpush1.msra.mxu0 %v460
    %499 = vmatprep.subr.mxu0 0.0
    %500 = vmatpush1.msra.mxu0 %v461
    %501 = vmatprep.subr.mxu0 0.0
    %502 = vmatpush1.msra.mxu0 %v462
    %503 = vmatprep.subr.mxu0 0.0
    %504 = vmatpush1.msra.mxu0 0.0
    %505 = vmatprep.subr.mxu0 0.0
    %506 = vmatpush1.msra.mxu0 0.0
    %507 = vmatprep.subr.mxu0 0.0
    %508 = vmatpush1.msra.mxu0 0.0
    %509 = vmatprep.subr.mxu0 0.0
    %510 = vmatpush1.msra.mxu0 0.0
    %511 = vmatprep.subr.mxu0 0.0
    %512 = vmatpush1.msra.mxu0 0.0
    %513 = vmatprep.subr.mxu0 0.0
    %514 = vmatpush1.msra.mxu0 0.0
    %515 = vmatprep.subr.mxu0 0.0
    %516 = vmatpush1.msra.mxu0 0.0
    %517 = vmatprep.subr.mxu0 0.0
    %518 = vmatpush1.msra.mxu0 0.0
    %519 = vmatprep.subr.mxu0 0.0
    %520 = vmatpush1.msra.mxu0 0.0
    %521 = vmatprep.subr.mxu0 0.0
    %522 = vmatpush1.msra.mxu0 0.0
    %523 = vmatprep.subr.mxu0 0.0
    %524 = vmatpush1.msra.mxu0 0.0
    %525 = vmatprep.subr.mxu0 0.0
    %526 = vmatpush1.msra.mxu0 0.0
    %527 = vmatprep.subr.mxu0 0.0
    %528 = vmatpush1.msra.mxu0 0.0
    %529 = vmatprep.subr.mxu0 0.0
    %530 = vmatpush1.msra.mxu0 0.0
    %531 = vmatprep.subr.mxu0 0.0
    %532 = vmatpush1.msra.mxu0 0.0
    %533 = vmatprep.subr.mxu0 0.0
    %534 = vmatpush1.msra.mxu0 0.0
    %535 = vmatprep.subr.mxu0 0.0
    %536 = vmatpush1.msra.mxu0 0.0
    %537 = vmatprep.subr.mxu0 0.0
    %538 = vmatpush1.msra.mxu0 0.0
    %539 = vmatprep.subr.mxu0 0.0
    %540 = vmatpush1.msra.mxu0 0.0
    %541 = vmatprep.subr.mxu0 0.0
    %542 = vmatpush1.msra.mxu0 0.0
    %543 = vmatprep.subr.mxu0 0.0
    %544 = vmatpush1.msra.mxu0 0.0
    %545 = vmatprep.subr.mxu0 0.0
    %546 = vmatpush1.msra.mxu0 0.0
    %547 = vmatprep.subr.mxu0 0.0
    %548 = vmatpush1.msra.mxu0 0.0
    %549 = vmatprep.subr.mxu0 0.0
    %550 = vmatpush1.msra.mxu0 0.0
    %551 = vmatprep.subr.mxu0 0.0
    %552 = vmatpush1.msra.mxu0 0.0
    %553 = vmatprep.subr.mxu0 0.0
    %554 = vmatpush1.msra.mxu0 0.0
    %555 = vmatprep.subr.mxu0 0.0
    %556 = vmatpush1.msra.mxu0 0.0
    %557 = vmatprep.subr.mxu0 0.0
    %558 = vmatpush1.msra.mxu0 0.0
    %559 = vmatprep.mubr.f32.mxu0 0.0
    %560 = vmatmul.mubr.f32.gmra.mrb[0].mxu0 %v490
    %v561 = vpop.f32.mrb[0].mxu0
    %v562 = vadd.f32 0.0, %v561
    %v563 = vpop.f32.mrb[0].mxu0
    %564 = vmatprep.mubr.f32.mxu0 0.0
    %565 = vmatmul.mubr.f32.gmra.mrb[0].mxu0 %v493
    %v566 = vpop.f32.mrb[0].mxu0
    %v567 = vadd.f32 0.0, %v566
    %v568 = vpop.f32.mrb[0].mxu0
    %569 = vdwg.mxu0
    %v570 = vadd.f32 %v58, %v562
    %v571 = vadd.f32 %v59, %v567
    %v572 = vld [vmem:[%s6] sm:$0x1]
    %v573 = vld [vmem:[%s5] sm:$0xff]
    %v574 = vld [vmem:[%s5 + $0x8] sm:$0xff]
    %576 = vset.pattern.permute.xlu0 0
    %577 = vperm.xlu0 %576, %v573
    %v578 = vpop.permute.xlu0 %577
    %581 = vset.pattern.permute.xlu0 0
    %582 = vperm.xlu0 %581, %v574
    %v583 = vpop.permute.xlu0 %582
    %v585 = vmul.f32 %v578, %v570
    %v586 = vmul.f32 %v583, %v571
    %v587 = vsel %vm182, %v585, 0.0
    %v588 = vsel %vm182, %v586, 0.0
    %v589 = vadd.f32 %v587, %v588
    %v590 = vrot.slane %v589, 4
    %v591 = vadd.f32 %v589, %v590
    %v592 = vrot.slane %v591, 2
    %v593 = vadd.f32 %v591, %v592
    %v594 = vrot.slane %v593, 1
    %v595 = vadd.f32 %v593, %v594
    %597 = vset.pattern.permute.xlu0 0
    %598 = vperm.xlu0 %597, %v572
    %v599 = vpop.permute.xlu0 %598
    %v601 = vlaneseq
    %v602 = vshrl.u32 %v601, 7
    %v603 = vsub.s32 0, %v602
    %v604 = vrot.slane %v599, %v603
    %v605 = vmul.f32 %v595, %v604
    %v606 = vmul.f32 %v578, %v605
    %v607 = vmul.f32 %v583, %v605
    %v608 = vadd.f32 %v606, 0.0
    %v609 = vadd.f32 %v607, 0.0
    %610 = vset.pattern.permute.xlu0 1
    %611 = vperm.xlu0 %610, %v573
    %v612 = vpop.permute.xlu0 %611
    %614 = vset.pattern.permute.xlu0 1
    %615 = vperm.xlu0 %614, %v574
    %v616 = vpop.permute.xlu0 %615
    %v618 = vmul.f32 %v612, %v570
    %v619 = vmul.f32 %v616, %v571
    %v620 = vsel %vm182, %v618, 0.0
    %v621 = vsel %vm182, %v619, 0.0
    %v622 = vadd.f32 %v620, %v621
    %v623 = vrot.slane %v622, 4
    %v624 = vadd.f32 %v622, %v623
    %v625 = vrot.slane %v624, 2
    %v626 = vadd.f32 %v624, %v625
    %v627 = vrot.slane %v626, 1
    %v628 = vadd.f32 %v626, %v627
    %629 = vset.pattern.permute.xlu0 1
    %630 = vperm.xlu0 %629, %v572
    %v631 = vpop.permute.xlu0 %630
    %v633 = vlaneseq
    %v634 = vshrl.u32 %v633, 7
    %v635 = vsub.s32 0, %v634
    %v636 = vrot.slane %v631, %v635
    %v637 = vmul.f32 %v628, %v636
    %v638 = vmul.f32 %v612, %v637
    %v639 = vmul.f32 %v616, %v637
    %v640 = vadd.f32 %v608, %v638
    %v641 = vadd.f32 %v609, %v639
    %v642 = vld [vmem:[%s13] sm:$0x1]
    %v644 = vlaneseq
    %v645 = vshrl.u32 %v644, 7
    %v646 = vsub.s32 0, %v645
    %v647 = vrot.slane %v642, %v646
    %v649 = vmul.f32 %v647, %v640
    %v650 = vmul.f32 %v647, %v641
    %v651 = vsub.f32 %v570, %v649
    %v652 = vsub.f32 %v571, %v650
    %v653 = vmul.f32 %v651, %v651
    %v654 = vmul.f32 %v652, %v652
    %v655 = vmul.f32 %v578, %v653
    %v656 = vmul.f32 %v583, %v654
    %v657 = vsel %vm182, %v655, 0.0
    %v658 = vsel %vm182, %v656, 0.0
    %v659 = vadd.f32 %v657, %v658
    %v660 = vrot.slane %v659, 4
    %v661 = vadd.f32 %v659, %v660
    %v662 = vrot.slane %v661, 2
    %v663 = vadd.f32 %v661, %v662
    %v664 = vrot.slane %v663, 1
    %v665 = vadd.f32 %v663, %v664
    %v666 = vmul.f32 %v665, %v604
    %v667 = vmul.f32 %v578, %v666
    %v668 = vmul.f32 %v583, %v666
    %v669 = vadd.f32 %v667, 0.0
    %v670 = vadd.f32 %v668, 0.0
    %v671 = vmul.f32 %v612, %v653
    %v672 = vmul.f32 %v616, %v654
    %v673 = vsel %vm182, %v671, 0.0
    %v674 = vsel %vm182, %v672, 0.0
    %v675 = vadd.f32 %v673, %v674
    %v676 = vrot.slane %v675, 4
    %v677 = vadd.f32 %v675, %v676
    %v678 = vrot.slane %v677, 2
    %v679 = vadd.f32 %v677, %v678
    %v680 = vrot.slane %v679, 1
    %v681 = vadd.f32 %v679, %v680
    %v682 = vmul.f32 %v681, %v636
    %v683 = vmul.f32 %v612, %v682
    %v684 = vmul.f32 %v616, %v682
    %v685 = vadd.f32 %v669, %v683
    %v686 = vadd.f32 %v670, %v684
    %v687 = vld [vmem:[%s11] sm:$0x1]
    %v689 = vlaneseq
    %v690 = vshrl.u32 %v689, 7
    %v691 = vsub.s32 0, %v690
    %v692 = vrot.slane %v687, %v691
    %v694 = vmul.f32 %v692, %v651
    %v695 = vmul.f32 %v692, %v652
    %v696 = vadd.f32 %v685, 1e-05
    %v697 = vadd.f32 %v686, 1e-05
    %v698 = vrsqrt.pop %v696
    %v699 = vrsqrt.pop %v697
    %v700 = vmul.f32 %v694, %v698
    %v701 = vmul.f32 %v695, %v699
    %v702 = vld [vmem:[%s12] sm:$0x1]
    %v704 = vlaneseq
    %v705 = vshrl.u32 %v704, 7
    %v706 = vsub.s32 0, %v705
    %v707 = vrot.slane %v702, %v706
    %v709 = vadd.f32 %v700, %v707
    %v710 = vadd.f32 %v701, %v707
    %711 = vst.msk [vmem:[#allocation3] sm:$0xff] %vm182, %v709
    %712 = vst.msk [vmem:[#allocation3 + $0x8] sm:$0xff] %vm182, %v710
    %v713 = vld [vmem:[%s14] sm:$0x1]
    %vm714 = vcmask 7168
    %v715 = vsel %vm714, %v483, 0.0
    %v716 = vsel %vm714, %v484, 0.0
    %v717 = vadd.f32 %v715, %v716
    %v718 = vsel %vm714, %v485, 0.0
    %v719 = vadd.f32 %v717, %v718
    %v720 = vsel %vm714, %v486, 0.0
    %v721 = vadd.f32 %v719, %v720
    %v722 = vrot.slane %v721, 4
    %v723 = vadd.f32 %v721, %v722
    %v724 = vrot.slane %v723, 2
    %v725 = vadd.f32 %v723, %v724
    %v726 = vrot.slane %v725, 1
    %v727 = vadd.f32 %v725, %v726
    %v728 = vrcp.pop 32.0
    %v729 = vmul.f32 %v727, %v728
    %v730 = vsub.f32 %v483, %v729
    %v731 = vsub.f32 %v484, %v729
    %v732 = vsub.f32 %v485, %v729
    %v733 = vsub.f32 %v486, %v729
    %v734 = vmul.f32 %v730, %v730
    %v735 = vmul.f32 %v731, %v731
    %v736 = vmul.f32 %v732, %v732
    %v737 = vmul.f32 %v733, %v733
    %v738 = vsel %vm714, %v734, 0.0
    %v739 = vsel %vm714, %v735, 0.0
    %v740 = vadd.f32 %v738, %v739
    %v741 = vsel %vm714, %v736, 0.0
    %v742 = vadd.f32 %v740, %v741
    %v743 = vsel %vm714, %v737, 0.0
    %v744 = vadd.f32 %v742, %v743
    %v745 = vrot.slane %v744, 4
    %v746 = vadd.f32 %v744, %v745
    %v747 = vrot.slane %v746, 2
    %v748 = vadd.f32 %v746, %v747
    %v749 = vrot.slane %v748, 1
    %v750 = vadd.f32 %v748, %v749
    %v751 = vmul.f32 %v750, %v728
    %v752 = vadd.f32 %v751, 1e-05
    %v753 = vrsqrt.pop %v752
    %v754 = vmul.f32 %v730, %v753
    %v755 = vmul.f32 %v731, %v753
    %v756 = vmul.f32 %v732, %v753
    %v757 = vmul.f32 %v733, %v753
    %v759 = vlaneseq
    %v760 = vshrl.u32 %v759, 7
    %v761 = vsub.s32 0, %v760
    %v762 = vrot.slane %v713, %v761
    %v764 = vmul.f32 %v754, %v762
    %v765 = vmul.f32 %v755, %v762
    %v766 = vmul.f32 %v756, %v762
    %v767 = vmul.f32 %v757, %v762
    %v768 = vld [vmem:[#allocation2] sm:$0x1]
    %v770 = vlaneseq
    %v771 = vshrl.u32 %v770, 7
    %v772 = vsub.s32 0, %v771
    %v773 = vrot.slane %v768, %v772
    %v775 = vadd.f32 %v764, %v773
    %v776 = vadd.f32 %v765, %v773
    %v777 = vadd.f32 %v766, %v773
    %v778 = vadd.f32 %v767, %v773
    %v779 = vmul.f32 %v483, %v483
    %v780 = vmul.f32 %v484, %v484
    %v781 = vmul.f32 %v485, %v485
    %v782 = vmul.f32 %v486, %v486
    %787 = vrot.lane.b32.xlu0 %v779, 127
    %v788 = vpop.permute.xlu0 %787
    %789 = vrot.lane.b32.xlu0 %v780, 127
    %v790 = vpop.permute.xlu0 %789
    %791 = vrot.lane.b32.xlu0 %v781, 127
    %v792 = vpop.permute.xlu0 %791
    %793 = vrot.lane.b32.xlu0 %v782, 127
    %v794 = vpop.permute.xlu0 %793
    %vm799 = vcmask 23552
    %v800 = vsel %vm799, %v788, 0.0
    %v801 = vsel %vm799, %v790, 0.0
    %v802 = vadd.f32 %v800, %v801
    %v803 = vsel %vm799, %v792, 0.0
    %v804 = vadd.f32 %v802, %v803
    %v805 = vsel %vm799, %v794, 0.0
    %v806 = vadd.f32 %v804, %v805
    %807 = vadd.xlane.f32.xlu0 %v806
    %v808 = vpop.xlane.xlu0 %807
    %v809 = vrot.slane %v808, 4
    %v810 = vadd.f32 %v808, %v809
    %v811 = vrot.slane %v810, 2
    %v812 = vadd.f32 %v810, %v811
    %v813 = vrot.slane %v812, 1
    %v814 = vadd.f32 %v812, %v813
    %s815 = vtos %v814
    %v816 = vstv %s815
    %v817 = vrcp.pop 96.0
    %v818 = vmul.f32 %v816, %v817
    %v819 = vadd.f32 %v818, 1e-05
    %v820 = vrsqrt.pop %v819
    %v821 = vmul.f32 %v483, %v820
    %v822 = vmul.f32 %v484, %v820
    %v823 = vmul.f32 %v485, %v820
    %v824 = vmul.f32 %v486, %v820
    %825 = vset.pattern.permute.xlu0 1
    %826 = vperm.xlu0 %825, %v762
    %v827 = vpop.permute.xlu0 %826
    %v829 = vmul.f32 %v821, %v827
    %v830 = vmul.f32 %v822, %v827
    %v831 = vmul.f32 %v823, %v827
    %v832 = vmul.f32 %v824, %v827
    %v833 = vsel %vm714, %v775, %v829
    %v834 = vsel %vm714, %v776, %v830
    %v835 = vsel %vm714, %v777, %v831
    %v836 = vsel %vm714, %v778, %v832
    %vm837 = vcmask 31744
    %838 = vst.msk [vmem:[%s17] sm:$0xff] %vm837, %v833
    %839 = vst.msk [vmem:[%s17 + $0x8] sm:$0xff] %vm837, %v834
    %840 = vst.msk [vmem:[%s17 + $0x10] sm:$0xff] %vm837, %v835
    %841 = vst.msk [vmem:[%s17 + $0x18] sm:$0xff] %vm837, %v836
    // Predicated region
    $region66: #{interaction_e_forward.1} parent=1 // pred_check
      _
    $region67: #{interaction_e_forward.1} parent=1 // pred_check_branch
      %843 = sbr.rel (0) target = $region69
    $region68: #{interaction_e_forward.1} parent=1 // pred_region
      %s845 = ssub.s32 256, 256
      %846 = vsyncadd [#allocation4], %s845
      %s847 = sshll.u32 [#allocation3], 4
      %s848 = int_to_ptr.vmem [resolvable:$true] %s847
      %853 = dma.vmem_to_hbm [thread:$0]  %s848, 256, %s16, [#allocation4], 128, 128, 8
    $region69: #{interaction_e_forward.1} parent=1 // pred_fallthru
      _
    // Predicated region
    $region70: #{interaction_e_forward.1} parent=1 // pred_check
      _
    $region71: #{interaction_e_forward.1} parent=1 // pred_check_branch
      %855 = sbr.rel (0) target = $region73
    $region72: #{interaction_e_forward.1} parent=1 // pred_region
      _
    $region73: #{interaction_e_forward.1} parent=1 // pred_fallthru
      _
    // Predicated region
    $region74: #{interaction_e_forward.1} parent=1 // pred_check
      _
    $region75: #{interaction_e_forward.1} parent=1 // pred_check_branch
      %857 = sbr.rel (0) target = $region77
    $region76: #{interaction_e_forward.1} parent=1 // pred_region
      %858 = dma.done [#allocation4], 256
    $region77: #{interaction_e_forward.1} parent=1 // pred_fallthru
      _
    // Predicated region
    $region78: #{interaction_e_forward.1} parent=1 // pred_check
      _
    $region79: #{interaction_e_forward.1} parent=1 // pred_check_branch
      %860 = sbr.rel (0) target = $region81
    $region80: #{interaction_e_forward.1} parent=1 // pred_region
      _
    $region81: #{interaction_e_forward.1} parent=1 // pred_fallthru
      _
    %861 = vsyncpa [#allocation4], 1

</llo_original>
